<compile_context>
chip_gen: v7x
topology: tpu7x:2x2x1
jax: 0.10.0
libtpu: 0.0.40
codegen_flags: <defaults>
</compile_context>

<pallas_src>
import jax
import jax.numpy as jnp
from jax.experimental import pallas as pl
from jax.experimental.pallas import tpu as pltpu


def _relu_kernel(x_ref, o_ref):
    o_ref[...] = jnp.maximum(x_ref[...], 0)


def _round_up(a, b):
    return ((a + b - 1) // b) * b


_LANE = 1024                      # lane-dense slab width (multiple of 128)
_MIN_STEPS = 8                    # >= 8 even steps: pipeline steady state,
                                  # >= 4 overlapped steps per v7x TensorCore
_BLOCK_BYTES = 2 * 1024 * 1024    # ~2 MiB blocks: HBM-roofline knee; 2x(in+out)
                                  # double-buffering = 8 MiB VMEM on all gens


def relu_pallas(x):
    orig_shape = x.shape
    dtype = x.dtype
    n = x.size
    if n == 0:
        return x

    itemsize = jnp.dtype(dtype).itemsize
    sub = {4: 8, 2: 16, 1: 32}.get(itemsize, 8)   # dtype-aware sublane multiple

    rows_needed = pl.cdiv(n, _LANE)

    # Tiny inputs: a single-step pallas_call is pure launch/DMA overhead.
    if rows_needed <= sub:
        return jnp.maximum(x, 0)

    x_flat = x.reshape(-1)
    if n % _LANE == 0:
        rows = rows_needed            # free reshape, no extra HBM pass
        padded = False
    else:
        # Flat size not lane-aligned: pad only up to a sublane-aligned row
        # count (worst case sub*LANE elements, ~32-64 KiB), never to a TR
        # multiple; ragged row-blocks are masked by Pallas.
        # TODO(synk): a fully copy-free tail path would need manual DMA over
        # pl.ANY refs; not worth it for a simple elementwise op.
        rows = _round_up(rows_needed, sub)
        x_flat = jnp.pad(x_flat, (0, rows * _LANE - n))
        padded = True
    x2d = x_flat.reshape(rows, _LANE)

    # Block rows: cap blocks at ~2 MiB, then pick an even step count
    # >= _MIN_STEPS so in-DMA / compute / out-DMA overlap and both v7x
    # TensorCores stream equal work.
    tr_max = max(sub, (_BLOCK_BYTES // (_LANE * itemsize)) // sub * sub)
    steps = max(_MIN_STEPS, pl.cdiv(rows, tr_max))
    steps += steps % 2
    tr = min(tr_max, max(sub, _round_up(pl.cdiv(rows, steps), sub)))
    grid = (pl.cdiv(rows, tr),)

    out2d = pl.pallas_call(
        _relu_kernel,
        out_shape=jax.ShapeDtypeStruct((rows, _LANE), dtype),
        grid_spec=pltpu.PrefetchScalarGridSpec(
            num_scalar_prefetch=0,
            grid=grid,
            in_specs=[pl.BlockSpec((tr, _LANE), lambda i: (i, 0))],
            out_specs=pl.BlockSpec((tr, _LANE), lambda i: (i, 0)),
        ),
        compiler_params=pltpu.CompilerParams(
            dimension_semantics=("parallel",),
        ),
    )(x2d)

    out_flat = out2d.reshape(-1)
    if padded:
        out_flat = out_flat[:n]
    return out_flat.reshape(orig_shape)


if __name__ == "__main__":
    key = jax.random.PRNGKey(0)
    k1, k2, k3, k4 = jax.random.split(key, 4)

    # 1) Module-consistent demo input (2, 4, 16, 16): tiny -> fused fallback.
    x1 = jax.random.normal(k1, (2, 4, 16, 16), dtype=jnp.float32)
    # 2) Lane-aligned f32 input -> Pallas path, 8 even grid steps, no padding.
    x2 = jax.random.normal(k2, (2, 8, 64, 64), dtype=jnp.float32)
    # 3) Lane-aligned f32 input whose row count (88) is not a multiple of the
    #    block rows -> exercises the masked ragged last block.
    x3 = jax.random.normal(k3, (8, 11, 32, 32), dtype=jnp.float32)
    # 4) Non-lane-aligned bf16 input -> small pad path + 16-row sublanes.
    x4 = jax.random.normal(k4, (3, 5, 41, 27), dtype=jnp.bfloat16)

    ok = True
    for x in (x1, x2, x3, x4):
        out = jax.block_until_ready(relu_pallas(x))
        ref = jnp.maximum(x, 0)
        ok &= (out.shape == x.shape) and (out.dtype == x.dtype)
        ok &= bool(jnp.allclose(out, ref))
    assert ok
    print("KERNEL_OK")
</pallas_src>

<mosaic_0001>
module attributes {stable_mosaic.version = 11 : i64} {
  func.func @_relu_kernel(%arg0: i32, %arg1: memref<8x1024xf32, #tpu.memory_space<vmem>>, %arg2: memref<8x1024xf32, #tpu.memory_space<vmem>>) attributes {dimension_semantics = [#tpu.dimension_semantics<parallel>], iteration_bounds = array<i64: 8>, scalar_prefetch = 0 : i64, scratch_operands = 0 : i64, tpu.core_type = #tpu.core_type<tc>, window_params = [{transform_indices = @transform_0, window_bounds = array<i64: 8, 1024>}, {transform_indices = @transform_1, window_bounds = array<i64: 8, 1024>}]} {
    %c0 = arith.constant 0 : index
    %c0_0 = arith.constant 0 : index
    %0 = vector.load %arg1[%c0, %c0_0] : memref<8x1024xf32, #tpu.memory_space<vmem>>, vector<8x1024xf32>
    %cst = arith.constant 0.000000e+00 : f32
    %1 = vector.broadcast %cst : f32 to vector<8x1024xf32>
    %2 = arith.maximumf %0, %1 : vector<8x1024xf32>
    %c0_1 = arith.constant 0 : index
    %c0_2 = arith.constant 0 : index
    %3 = vector.load %arg2[%c0_1, %c0_2] : memref<8x1024xf32, #tpu.memory_space<vmem>>, vector<8x1024xf32>
    tpu.vector_store %arg2[%c0_1, %c0_2], %2 {strides = array<i32>} : memref<8x1024xf32, #tpu.memory_space<vmem>>, vector<8x1024xf32>,
    return
  }
  func.func @transform_0(%arg0: i32) -> (i32, i32) {
    %c0_i32 = arith.constant 0 : i32
    %c0_i32_0 = arith.constant 0 : i32
    return %arg0, %c0_i32 : i32, i32
  }
  func.func @transform_1(%arg0: i32) -> (i32, i32) {
    %c0_i32 = arith.constant 0 : i32
    %c0_i32_0 = arith.constant 0 : i32
    return %arg0, %c0_i32 : i32, i32
  }
}

</mosaic_0001>

<llo_original>
// kernel: tpu_custom_call.1
$region0: #{tpu_custom_call.1}
  #allocation0 [shape = 'u32[]', space=smem, size = 0x4, offset = 0x4, fixed_abs, tag = 'smem constant byte address 0x4 - core index']
  #allocation1 [shape = 'u32[144,128]{1,0:T(1,128)}', space=vmem, size = 0x12000, scoped, tag = 'internal scratch']
  %s0 = inlined_call_operand.hbm [shape: f32[64,1024], index: 0, kind: input, shape index: {}]
  %s1 = inlined_call_operand.hbm [shape: f32[64,1024], index: 1, kind: output, shape index: {}]
  %s2 = sld [smem:[#allocation0]]
  $region41: #{tpu_custom_call.1} parent=0
    _
  %s4 = ssub.s32 1, %s2
  %s5 = scalar_select 0, %s4, %s2
  $region1: #{tpu_custom_call.1} parent=0
    #allocation2 [shape = 'u8[65536]{0}', space=vmem, size = 0x10000, scoped, tag = 'input window, operand 0']
    #allocation3 [shape = 's32[2]{0}', space=sflag, size = 0x8, scoped, tag = 'scoped memory for tpu_custom_call.1']
    #allocation4 [shape = 's32[2]{0}', space=sflag, size = 0x8, scoped, tag = 'scoped memory for tpu_custom_call.1']
    #allocation5 [shape = 'u8[65536]{0}', space=vmem, size = 0x10000, scoped, tag = 'output window, operand 0']
    %6 = vsyncpa [#allocation3], 0
    %s7 = scalar_lea.sflag [#allocation3], 1
    %8 = vsyncpa %s7, 0
    %9 = vsyncpa [#allocation4], 0
    %s10 = scalar_lea.sflag [#allocation4], 1
    %11 = vsyncpa %s10, 0
    loop: start=0, step=1, limit=10
    $region2: #{tpu_custom_call.1} parent=1 // loop_pre_header
      _
    $region3: #{tpu_custom_call.1} parent=1 // loop_header
      %s13 = sphi 0, %s17
      %p14 = scmp.ge.s32.totalorder %s13, 10
      %s23 = sphi 0, %s25
      %s26 = sphi 0, %s23
      %s27 = sphi 0, %s26
      %s43 = sphi 0, %s27
      %s49 = sphi 0, %s51
      %s52 = sphi 0, %s49
      %s53 = sphi 0, %s52
      %s69 = sphi 0, %s53
    $region4: #{tpu_custom_call.1} parent=1 // loop_header_branch
      %16 = sbr.rel (%p14) target = $region8
    $region5: #{tpu_custom_call.1} parent=1 // loop_body
      %s18 = ssub.s32 %s13, 1
      %s19 = ssub.s32 %s13, 2
      %s20 = sadd.s32 %s13, 1
      %s21 = ssub.s32 %s13, %s20
      %p22 = scmp.eq.s32.totalorder %s21, 0
      %s24 = sadd.s32 %s23, 1
      %s25 = scalar_select %p22, %s23, %s24
      %p28 = pneg %p22
      %p29 = scmp.eq.s32.totalorder %s13, 7
      %p30 = por %p28, %p29
      %p31 = scmp.ne.s32.totalorder %s23, %s26
      %p32 = scmp.eq.s32.totalorder %s13, 0
      %p33 = por %p31, %p32
      %p34 = scmp.ne.s32.totalorder %s23, %s26
      %p35 = scmp.eq.s32.totalorder %s18, 7
      %p36 = por %p34, %p35
      %p37 = scmp.ne.s32.totalorder %s26, %s27
      %p38 = scmp.eq.s32.totalorder %s18, 0
      %p39 = por %p37, %p38
      %p40 = scmp.ne.s32.totalorder %s26, %s27
      %p41 = scmp.eq.s32.totalorder %s19, 7
      %p42 = por %p40, %p41
      %p44 = scmp.ne.s32.totalorder %s27, %s43
      %p45 = scmp.eq.s32.totalorder %s19, 0
      %p46 = por %p44, %p45
      %s47 = ssub.s32 %s13, %s20
      %p48 = scmp.eq.s32.totalorder %s47, 0
      %s50 = sadd.s32 %s49, 1
      %s51 = scalar_select %p48, %s49, %s50
      %p54 = pneg %p48
      %p55 = scmp.eq.s32.totalorder %s13, 7
      %p56 = por %p54, %p55
      %p57 = scmp.ne.s32.totalorder %s49, %s52
      %p58 = scmp.eq.s32.totalorder %s13, 0
      %p59 = por %p57, %p58
      %p60 = scmp.ne.s32.totalorder %s49, %s52
      %p61 = scmp.eq.s32.totalorder %s18, 7
      %p62 = por %p60, %p61
      %p63 = scmp.ne.s32.totalorder %s52, %s53
      %p64 = scmp.eq.s32.totalorder %s18, 0
      %p65 = por %p63, %p64
      %p66 = scmp.ne.s32.totalorder %s52, %s53
      %p67 = scmp.eq.s32.totalorder %s19, 7
      %p68 = por %p66, %p67
      %p70 = scmp.ne.s32.totalorder %s53, %s69
      %p71 = scmp.eq.s32.totalorder %s19, 0
      %p72 = por %p70, %p71
      %p73 = scmp.le.s32.totalorder 1, %s13
      %p74 = scmp.lt.s32.totalorder %s13, 9
      %p75 = pnand %p73, %p74
      %p76 = pneg %p75
      // Predicated region
      $region9: #{tpu_custom_call.1} parent=5 // pred_check
        _
      $region10: #{tpu_custom_call.1} parent=5 // pred_check_branch
        %78 = sbr.rel (%p75) target = $region12
      $region11: #{tpu_custom_call.1} parent=5 // pred_region
        %s79 = ssub.s32 %s13, 1
      $region12: #{tpu_custom_call.1} parent=5 // pred_fallthru
        _
      %p80 = scmp.lt.s32.totalorder %s13, 8
      // Predicated region
      $region13: #{tpu_custom_call.1} parent=5 // pred_check
        %p81 = pneg %p80
      $region14: #{tpu_custom_call.1} parent=5 // pred_check_branch
        %83 = sbr.rel (%p81) target = $region16
      $region15: #{tpu_custom_call.1} parent=5 // pred_region
        // Predicated region
        $region17: #{tpu_custom_call.1} parent=15 // pred_check
          %p84 = pneg %p33
        $region18: #{tpu_custom_call.1} parent=15 // pred_check_branch
          %86 = sbr.rel (%p84) target = $region20
        $region19: #{tpu_custom_call.1} parent=15 // pred_region
          %s87 = sand.u32 %s23, 1
          %s88 = scalar_lea.sflag [#allocation3], %s87
          %s89 = sand.u32 %s23, 1
          %s90 = smul.addr %s89, 64
          %s91 = scalar_lea.vmem [#allocation2], %s90
          %s93 = ssub.s32 1024, 1024
          %94 = vsyncadd %s88, %s93
          %s95 = smul.addr %s13, 8
          %s96 = smul.addr %s95, 128
          %s97 = scalar_lea.hbm %s0, %s96
          %s99 = sshll.u32 %s91, 4
          %s100 = int_to_ptr.vmem [resolvable:$true] %s99
          %102 = dma.hbm_to_vmem [thread:$0]  %s97, 1024, %s100, %s88
        $region20: #{tpu_custom_call.1} parent=15 // pred_fallthru
          _
      $region16: #{tpu_custom_call.1} parent=5 // pred_fallthru
        _
      %p103 = scmp.le.s32.totalorder 1, %s13
      %p104 = scmp.lt.s32.totalorder %s13, 9
      %p105 = pnand %p103, %p104
      %p106 = pneg %p105
      // Predicated region
      $region21: #{tpu_custom_call.1} parent=5 // pred_check
        _
      $region22: #{tpu_custom_call.1} parent=5 // pred_check_branch
        %108 = sbr.rel (%p105) target = $region24
      $region23: #{tpu_custom_call.1} parent=5 // pred_region
        %s109 = ssub.s32 %s13, 1
        %s110 = sand.u32 %s26, 1
        %s111 = scalar_lea.sflag [#allocation3], %s110
        %s112 = sand.u32 %s26, 1
        %s113 = smul.addr %s112, 64
        %s114 = scalar_lea.vmem [#allocation2], %s113
        // Predicated region
        $region25: #{tpu_custom_call.1} parent=23 // pred_check
          %p115 = pneg %p39
        $region26: #{tpu_custom_call.1} parent=23 // pred_check_branch
          %117 = sbr.rel (%p115) target = $region28
        $region27: #{tpu_custom_call.1} parent=23 // pred_region
          %118 = dma.done %s111, 1024
        $region28: #{tpu_custom_call.1} parent=23 // pred_fallthru
          _
        %s119 = sand.u32 %s26, 1
        %s120 = scalar_lea.sflag [#allocation3], %s119
        %s121 = sand.u32 %s26, 1
        %s122 = smul.addr %s121, 64
        %s123 = scalar_lea.vmem [#allocation2], %s122
        %p124 = pneg %p39
        %p125 = pneg %p36
        %p126 = pneg %p65
        %p127 = pneg %p62
        %s128 = sand.u32 %s52, 1
        %s129 = scalar_lea.sflag [#allocation4], %s128
        %s130 = sand.u32 %s52, 1
        %s131 = smul.addr %s130, 64
        %s132 = scalar_lea.vmem [#allocation5], %s131
        %v133 = vld [vmem:[%s114] sm:$0xff]
        %v134 = vld [vmem:[%s114 + $0x8] sm:$0xff]
        %v135 = vld [vmem:[%s114 + $0x10] sm:$0xff]
        %v136 = vld [vmem:[%s114 + $0x18] sm:$0xff]
        %v137 = vld [vmem:[%s114 + $0x20] sm:$0xff]
        %v138 = vld [vmem:[%s114 + $0x28] sm:$0xff]
        %v139 = vld [vmem:[%s114 + $0x30] sm:$0xff]
        %v140 = vld [vmem:[%s114 + $0x38] sm:$0xff]
        %v141 = vmax.f32 %v133, 0.0
        %v142 = vmax.f32 %v134, 0.0
        %v143 = vmax.f32 %v135, 0.0
        %v144 = vmax.f32 %v136, 0.0
        %v145 = vmax.f32 %v137, 0.0
        %v146 = vmax.f32 %v138, 0.0
        %v147 = vmax.f32 %v139, 0.0
        %v148 = vmax.f32 %v140, 0.0
        %149 = vst [vmem:[%s132] sm:$0xff] %v141
        %150 = vst [vmem:[%s132 + $0x8] sm:$0xff] %v142
        %151 = vst [vmem:[%s132 + $0x10] sm:$0xff] %v143
        %152 = vst [vmem:[%s132 + $0x18] sm:$0xff] %v144
        %153 = vst [vmem:[%s132 + $0x20] sm:$0xff] %v145
        %154 = vst [vmem:[%s132 + $0x28] sm:$0xff] %v146
        %155 = vst [vmem:[%s132 + $0x30] sm:$0xff] %v147
        %156 = vst [vmem:[%s132 + $0x38] sm:$0xff] %v148
        %s157 = sand.u32 %s52, 1
        %s158 = scalar_lea.sflag [#allocation4], %s157
        %s159 = sand.u32 %s52, 1
        %s160 = smul.addr %s159, 64
        %s161 = scalar_lea.vmem [#allocation5], %s160
        // Predicated region
        $region29: #{tpu_custom_call.1} parent=23 // pred_check
          %p162 = pneg %p62
        $region30: #{tpu_custom_call.1} parent=23 // pred_check_branch
          %164 = sbr.rel (%p162) target = $region32
        $region31: #{tpu_custom_call.1} parent=23 // pred_region
          %s166 = ssub.s32 1024, 1024
          %167 = vsyncadd %s158, %s166
          %s168 = smul.addr %s18, 8
          %s169 = smul.addr %s168, 128
          %s170 = scalar_lea.hbm %s1, %s169
          %s172 = sshll.u32 %s161, 4
          %s173 = int_to_ptr.vmem [resolvable:$true] %s172
          %175 = dma.vmem_to_hbm [thread:$0]  %s173, 1024, %s170, %s158
        $region32: #{tpu_custom_call.1} parent=23 // pred_fallthru
          _
      $region24: #{tpu_custom_call.1} parent=5 // pred_fallthru
        _
      %p176 = scmp.le.s32.totalorder 2, %s13
      // Predicated region
      $region33: #{tpu_custom_call.1} parent=5 // pred_check
        %p177 = pneg %p176
      $region34: #{tpu_custom_call.1} parent=5 // pred_check_branch
        %179 = sbr.rel (%p177) target = $region36
      $region35: #{tpu_custom_call.1} parent=5 // pred_region
        %s180 = ssub.s32 %s13, 2
        // Predicated region
        $region37: #{tpu_custom_call.1} parent=35 // pred_check
          %p181 = pneg %p68
        $region38: #{tpu_custom_call.1} parent=35 // pred_check_branch
          %183 = sbr.rel (%p181) target = $region40
        $region39: #{tpu_custom_call.1} parent=35 // pred_region
          %s184 = sand.u32 %s53, 1
          %s185 = scalar_lea.sflag [#allocation4], %s184
          %s186 = sand.u32 %s53, 1
          %s187 = smul.addr %s186, 64
          %s188 = scalar_lea.vmem [#allocation5], %s187
          %189 = dma.done %s185, 1024
        $region40: #{tpu_custom_call.1} parent=35 // pred_fallthru
          _
      $region36: #{tpu_custom_call.1} parent=5 // pred_fallthru
        _
    $region6: #{tpu_custom_call.1} parent=1 // loop_footer
      %s17 = sadd.s32 1, %s13
    $region7: #{tpu_custom_call.1} parent=1 // loop_footer_branch
      %12 = sbr.rel target = $region3
    $region8: #{tpu_custom_call.1} parent=1 // loop_exit
      _
    %190 = vsyncpa [#allocation3], 1
    %s191 = scalar_lea.sflag [#allocation3], 1
    %192 = vsyncpa %s191, 1
    %193 = vsyncpa [#allocation4], 1
    %s194 = scalar_lea.sflag [#allocation4], 1
    %195 = vsyncpa %s194, 1

</llo_original>
